<compile_context>
chip_gen: v7x
topology: tpu7x:2x2x1
jax: 0.10.0
libtpu: 0.0.40
codegen_flags: <defaults>
</compile_context>

<pallas_src>
import functools

import jax
import jax.numpy as jnp
from jax.experimental import pallas as pl
from jax.experimental.pallas import tpu as pltpu


# ---------------------------------------------------------------------------
# Kernel 1: encoder + variational heads + reparameterization + KL
# grid = (batch_blocks, vocab_tiles); vocab is a reduction axis (innermost).
# ---------------------------------------------------------------------------
def _nvdm_encoder_kernel(x_ref, w1_ref, b1_ref, w2_ref, b2_ref,
                         wmuls_ref, bmuls_ref, eps_ref,
                         doc_ref, kl_ref, acc_ref, *, n_topic, n_sample):
    v = pl.program_id(1)

    @pl.when(v == 0)
    def _():
        acc_ref[...] = jnp.zeros_like(acc_ref)

    x = x_ref[...].astype(jnp.float32)                        # (Bb, tv)
    w1 = w1_ref[...].astype(jnp.float32)                      # (tv, H), bf16 storage
    acc_ref[...] += jnp.dot(x, w1, preferred_element_type=jnp.float32)

    @pl.when(v == pl.num_programs(1) - 1)
    def _():
        h1 = jnp.tanh(acc_ref[...] + b1_ref[...])
        h2 = jnp.tanh(jnp.dot(h1, w2_ref[...].astype(jnp.float32),
                              preferred_element_type=jnp.float32) + b2_ref[...])
        # fused mu / log_sigma head: one (H, 2T) matmul, then slice
        muls = jnp.dot(h2, wmuls_ref[...].astype(jnp.float32),
                       preferred_element_type=jnp.float32) + bmuls_ref[...]
        mu = muls[:, :n_topic]                                # (Bb, T)
        log_sigma = muls[:, n_topic:]                         # (Bb, T)
        sigma = jnp.exp(log_sigma)

        # stacked reparameterized doc vectors for all samples, sample-major:
        # rows [s*Bb : (s+1)*Bb] hold sample s for this batch block.
        docs = [sigma * eps_ref[s] + mu for s in range(n_sample)]
        doc_ref[...] = docs[0] if n_sample == 1 else jnp.concatenate(docs, axis=0)

        # KL: -0.5 * sum(1 - mu^2 + 2 log_sigma - sigma^2)   (sigma^2 reuses exp)
        kl_ref[...] = -0.5 * jnp.sum(
            1.0 - mu * mu + 2.0 * log_sigma - sigma * sigma, axis=1, keepdims=True)


# ---------------------------------------------------------------------------
# Kernel 2: decoder with fused multi-sample matmul + online log-softmax loss.
# grid = (batch_blocks, vocab_tiles); vocab is a reduction axis (innermost).
# ---------------------------------------------------------------------------
def _nvdm_decoder_kernel(doc_ref, x_ref, wdec_ref, bdec_ref, kl_ref,
                         stats_ref, m_ref, l_ref, xr_ref, xs_ref,
                         *, n_sample, block_b, kl_weight):
    v = pl.program_id(1)

    @pl.when(v == 0)
    def _():
        m_ref[...] = jnp.full_like(m_ref, -jnp.inf)
        l_ref[...] = jnp.zeros_like(l_ref)
        xr_ref[...] = jnp.zeros_like(xr_ref)
        xs_ref[...] = jnp.zeros_like(xs_ref)

    x = x_ref[...].astype(jnp.float32)                        # (Bb, tv)
    w = wdec_ref[...].astype(jnp.float32)                     # (T, tv), bf16 storage
    doc = doc_ref[...]                                        # (NS*Bb, T) -- already stacked

    # one MXU call covers all samples for this vocab tile
    raw = jnp.dot(doc, w, preferred_element_type=jnp.float32) + bdec_ref[...]

    # online logsumexp over the vocab axis, per stacked (sample, batch-row)
    m_prev = m_ref[...]
    m_new = jnp.maximum(m_prev, jnp.max(raw, axis=1, keepdims=True))
    l_ref[...] = (jnp.exp(m_prev - m_new) * l_ref[...]
                  + jnp.sum(jnp.exp(raw - m_new), axis=1, keepdims=True))
    m_ref[...] = m_new

    # accumulate sum_v x * (sum_s raw_s)  and  sum_v x   (static unroll over NS)
    raw_sum = raw[0:block_b]
    for s in range(1, n_sample):
        raw_sum = raw_sum + raw[s * block_b:(s + 1) * block_b]
    xr_ref[...] += jnp.sum(x * raw_sum, axis=1, keepdims=True)
    xs_ref[...] += jnp.sum(x, axis=1, keepdims=True)

    @pl.when(v == pl.num_programs(1) - 1)
    def _():
        lse = m_ref[...] + jnp.log(l_ref[...])                # (NS*Bb, 1)
        lse_sum = lse[0:block_b]
        for s in range(1, n_sample):
            lse_sum = lse_sum + lse[s * block_b:(s + 1) * block_b]
        # loss_rec = -(1/NS) * sum_s sum_v x * (raw_s - lse_s)
        rec = -(xr_ref[...] - xs_ref[...] * lse_sum) / float(n_sample)   # (Bb, 1)
        kl = kl_ref[...]                                      # (Bb, 1)
        total = rec + kl_weight * kl
        # lane-dense packed output: lane 0 = rec, lane 1 = kl, lane 2 = total
        lane = jax.lax.broadcasted_iota(jnp.int32, stats_ref.shape, 1)
        stats_ref[...] = jnp.where(lane == 0, rec,
                                   jnp.where(lane == 1, kl,
                                             jnp.where(lane == 2, total, 0.0)))


# ---------------------------------------------------------------------------
# Wrapper
# ---------------------------------------------------------------------------
def nvdm_forward_pallas(x_bow, params, eps, *, kl_weight=1.0,
                        block_v=128, block_b=8):
    """NVDM forward pass.

    x_bow : (B, V) f32 bag-of-words counts (offsets=None path; the frozen identity
            EmbeddingBag of the reference module is a no-op on BoW input).
    eps   : (NS, B, T) f32 Gaussian noise (reparameterization).
    Returns dict with 'rec', 'kl', 'total', each of shape (B,).
    """
    # TODO(synk): EmbeddingBag(text, offsets) token-gather path not implemented;
    #             with the frozen identity embedding it equals passing BoW directly.
    # TODO(synk): the module draws eps internally; here it is an explicit input
    #             so the kernel is deterministic (could use pltpu.prng_* instead).
    B, V = x_bow.shape
    NS, _, T = eps.shape
    H = params["w1"].shape[1]
    assert V % block_v == 0, "vocab size must be a multiple of block_v"
    assert B % block_b == 0, "batch size must be a multiple of block_b"
    nb, nv = B // block_b, V // block_v
    SB = NS * block_b                                         # stacked rows per batch block

    # bf16 weight storage (halves HBM traffic & VMEM); biases and activations f32.
    w1 = params["w1"].astype(jnp.bfloat16)
    w2 = params["w2"].astype(jnp.bfloat16)
    wmuls = jnp.concatenate([params["wmu"], params["wls"]], axis=1).astype(jnp.bfloat16)
    bmuls = jnp.concatenate([params["bmu"], params["bls"]], axis=1).astype(jnp.float32)
    wdec = params["wdec"].astype(jnp.bfloat16)
    b1 = params["b1"].astype(jnp.float32)
    b2 = params["b2"].astype(jnp.float32)
    bdec = params["bdec"].astype(jnp.float32)

    cparams = pltpu.CompilerParams(
        dimension_semantics=("parallel", "arbitrary"),
        vmem_limit_bytes=48 * 1024 * 1024)

    # ---- kernel 1: encoder / heads / reparameterization / KL -------------
    enc_kernel = functools.partial(_nvdm_encoder_kernel, n_topic=T, n_sample=NS)
    doc, kl = pl.pallas_call(
        enc_kernel,
        out_shape=(jax.ShapeDtypeStruct((nb, SB, T), jnp.float32),
                   jax.ShapeDtypeStruct((B, 1), jnp.float32)),
        grid_spec=pltpu.PrefetchScalarGridSpec(
            num_scalar_prefetch=0,
            grid=(nb, nv),
            in_specs=[
                pl.BlockSpec((block_b, block_v), lambda b, v: (b, v)),    # x tile
                pl.BlockSpec((block_v, H), lambda b, v: (v, 0)),          # w1 tile
                pl.BlockSpec((1, H), lambda b, v: (0, 0)),                # b1
                pl.BlockSpec((H, H), lambda b, v: (0, 0)),                # w2
                pl.BlockSpec((1, H), lambda b, v: (0, 0)),                # b2
                pl.BlockSpec((H, 2 * T), lambda b, v: (0, 0)),            # [wmu|wls]
                pl.BlockSpec((1, 2 * T), lambda b, v: (0, 0)),            # [bmu|bls]
                pl.BlockSpec((NS, block_b, T), lambda b, v: (0, b, 0)),   # eps
            ],
            out_specs=(
                pl.BlockSpec((None, SB, T), lambda b, v: (b, 0, 0)),      # stacked doc vecs
                pl.BlockSpec((block_b, 1), lambda b, v: (b, 0)),          # kl
            ),
            scratch_shapes=[pltpu.VMEM((block_b, H), jnp.float32)],       # x@w1 acc
        ),
        compiler_params=cparams,
    )(x_bow, w1, b1, w2, b2, wmuls, bmuls, eps)

    # ---- kernel 2: decoder + online-LSE reconstruction loss ---------------
    dec_kernel = functools.partial(_nvdm_decoder_kernel, n_sample=NS,
                                   block_b=block_b, kl_weight=float(kl_weight))
    stats = pl.pallas_call(
        dec_kernel,
        out_shape=jax.ShapeDtypeStruct((B, 128), jnp.float32),
        grid_spec=pltpu.PrefetchScalarGridSpec(
            num_scalar_prefetch=0,
            grid=(nb, nv),
            in_specs=[
                pl.BlockSpec((None, SB, T), lambda b, v: (b, 0, 0)),      # stacked doc vecs
                pl.BlockSpec((block_b, block_v), lambda b, v: (b, v)),    # x tile
                pl.BlockSpec((T, block_v), lambda b, v: (0, v)),          # wdec tile
                pl.BlockSpec((1, block_v), lambda b, v: (0, v)),          # bdec tile
                pl.BlockSpec((block_b, 1), lambda b, v: (b, 0)),          # kl
            ],
            out_specs=pl.BlockSpec((block_b, 128), lambda b, v: (b, 0)),  # packed losses
            scratch_shapes=[
                pltpu.VMEM((SB, 1), jnp.float32),                         # running max
                pltpu.VMEM((SB, 1), jnp.float32),                         # running sum exp
                pltpu.VMEM((block_b, 1), jnp.float32),                    # sum x*raw
                pltpu.VMEM((block_b, 1), jnp.float32),                    # sum x
            ],
        ),
        compiler_params=cparams,
    )(doc, x_bow, wdec, bdec, kl)

    return {"rec": stats[:, 0], "kl": stats[:, 1], "total": stats[:, 2]}


# ---------------------------------------------------------------------------
# Pure-JAX reference (mirrors the PyTorch module; weights routed through the
# same bf16 storage rounding the kernels use).
# ---------------------------------------------------------------------------
def nvdm_forward_ref(x_bow, params, eps, *, kl_weight=1.0):
    f32 = lambda w: w.astype(jnp.bfloat16).astype(jnp.float32)
    n_sample = eps.shape[0]
    h1 = jnp.tanh(x_bow @ f32(params["w1"]) + params["b1"])
    h2 = jnp.tanh(h1 @ f32(params["w2"]) + params["b2"])
    mu = h2 @ f32(params["wmu"]) + params["bmu"]
    log_sigma = h2 @ f32(params["wls"]) + params["bls"]
    loss_rec = 0.0
    for s in range(n_sample):
        doc_vec = jnp.exp(log_sigma) * eps[s] + mu
        logits = jax.nn.log_softmax(doc_vec @ f32(params["wdec"]) + params["bdec"], axis=1)
        loss_rec = loss_rec + jnp.sum(x_bow * logits, axis=1)
    loss_rec = -loss_rec / n_sample
    kl = -0.5 * jnp.sum(1.0 - mu ** 2 + 2.0 * log_sigma - jnp.exp(2.0 * log_sigma), axis=1)
    return {"rec": loss_rec, "kl": kl, "total": loss_rec + kl_weight * kl}


def init_params(key, vocab_size, n_hidden, n_topic):
    """Deterministic synthetic parameters; weights (in, out), biases (1, out)."""
    ks = jax.random.split(key, 10)
    s = 0.05
    return {
        "w1": s * jax.random.normal(ks[0], (vocab_size, n_hidden), jnp.float32),
        "b1": s * jax.random.normal(ks[1], (1, n_hidden), jnp.float32),
        "w2": s * jax.random.normal(ks[2], (n_hidden, n_hidden), jnp.float32),
        "b2": s * jax.random.normal(ks[3], (1, n_hidden), jnp.float32),
        "wmu": s * jax.random.normal(ks[4], (n_hidden, n_topic), jnp.float32),
        "bmu": s * jax.random.normal(ks[5], (1, n_topic), jnp.float32),
        "wls": s * jax.random.normal(ks[6], (n_hidden, n_topic), jnp.float32),
        "bls": s * jax.random.normal(ks[7], (1, n_topic), jnp.float32),
        "wdec": s * jax.random.normal(ks[8], (n_topic, vocab_size), jnp.float32),
        "bdec": s * jax.random.normal(ks[9], (1, vocab_size), jnp.float32),
    }


if __name__ == "__main__":
    # Small shapes consistent with the module: batch=8, vocab=512 (4 vocab tiles
    # of 128 to exercise the grid / online-LSE), hidden=32, topics=16, n_sample=2.
    B, V, H, T, NS = 8, 512, 32, 16, 2
    key = jax.random.PRNGKey(0)
    k_param, k_x, k_eps = jax.random.split(key, 3)

    params = init_params(k_param, V, H, T)
    x_bow = jax.random.poisson(k_x, 1.0, (B, V)).astype(jnp.float32)  # BoW counts
    eps = jax.random.normal(k_eps, (NS, B, T), jnp.float32)

    out = nvdm_forward_pallas(x_bow, params, eps, kl_weight=1.0,
                              block_v=128, block_b=8)
    out = jax.tree.map(jax.block_until_ready, out)

    ref = nvdm_forward_ref(x_bow, params, eps, kl_weight=1.0)
    for name in ("rec", "kl", "total"):
        assert jnp.allclose(out[name], ref[name], atol=1e-3, rtol=1e-3), (
            name, out[name], ref[name])

    print("KERNEL_OK")
</pallas_src>

<mosaic_0001>
module attributes {stable_mosaic.version = 11 : i64} {
  func.func @_nvdm_encoder_kernel(%arg0: i32, %arg1: i32, %arg2: memref<8x128xf32, #tpu.memory_space<vmem>>, %arg3: memref<128x32xbf16, #tpu.memory_space<vmem>>, %arg4: memref<1x32xf32, #tpu.memory_space<vmem>>, %arg5: memref<32x32xbf16, #tpu.memory_space<vmem>>, %arg6: memref<1x32xf32, #tpu.memory_space<vmem>>, %arg7: memref<32x32xbf16, #tpu.memory_space<vmem>>, %arg8: memref<1x32xf32, #tpu.memory_space<vmem>>, %arg9: memref<2x8x16xf32, #tpu.memory_space<vmem>>, %arg10: memref<1x16x16xf32, #tpu.memory_space<vmem>>, %arg11: memref<8x1xf32, #tpu.memory_space<vmem>>, %arg12: memref<8x32xf32, #tpu.memory_space<vmem>>) attributes {dimension_semantics = [#tpu.dimension_semantics<parallel>, #tpu.dimension_semantics<arbitrary>], iteration_bounds = array<i64: 1, 4>, scalar_prefetch = 0 : i64, scratch_operands = 1 : i64, tpu.core_type = #tpu.core_type<tc>, window_params = [{transform_indices = @transform_0, window_bounds = array<i64: 8, 128>}, {transform_indices = @transform_1, window_bounds = array<i64: 128, 32>}, {pipeline_mode = #tpu.pipeline_mode<synchronous>, transform_indices = @transform_2, window_bounds = array<i64: 1, 32>}, {pipeline_mode = #tpu.pipeline_mode<synchronous>, transform_indices = @transform_3, window_bounds = array<i64: 32, 32>}, {pipeline_mode = #tpu.pipeline_mode<synchronous>, transform_indices = @transform_4, window_bounds = array<i64: 1, 32>}, {pipeline_mode = #tpu.pipeline_mode<synchronous>, transform_indices = @transform_5, window_bounds = array<i64: 32, 32>}, {pipeline_mode = #tpu.pipeline_mode<synchronous>, transform_indices = @transform_6, window_bounds = array<i64: 1, 32>}, {transform_indices = @transform_7, window_bounds = array<i64: 2, 8, 16>}, {transform_indices = @transform_8, window_bounds = array<i64: 1, 16, 16>}, {transform_indices = @transform_9, window_bounds = array<i64: 8, 1>}]} {
    %c0_i32 = arith.constant 0 : i32
    %0 = arith.cmpi eq, %arg1, %c0_i32 : i32
    %1 = arith.extui %0 : i1 to i32
    %c0_i32_0 = arith.constant 0 : i32
    %2 = arith.cmpi ne, %1, %c0_i32_0 : i32
    scf.if %2 {
      %cst_9 = arith.constant 0.000000e+00 : f32
      %13 = vector.broadcast %cst_9 : f32 to vector<8x32xf32>
      %c0_10 = arith.constant 0 : index
      %c0_11 = arith.constant 0 : index
      %14 = vector.load %arg12[%c0_10, %c0_11] : memref<8x32xf32, #tpu.memory_space<vmem>>, vector<8x32xf32>
      tpu.vector_store %arg12[%c0_10, %c0_11], %13 {strides = array<i32>} : memref<8x32xf32, #tpu.memory_space<vmem>>, vector<8x32xf32>,
    } else {
    }
    %c0 = arith.constant 0 : index
    %c0_1 = arith.constant 0 : index
    %3 = vector.load %arg2[%c0, %c0_1] : memref<8x128xf32, #tpu.memory_space<vmem>>, vector<8x128xf32>
    %c0_2 = arith.constant 0 : index
    %c0_3 = arith.constant 0 : index
    %4 = vector.load %arg3[%c0_2, %c0_3] : memref<128x32xbf16, #tpu.memory_space<vmem>>, vector<128x32xbf16>
    %5 = arith.extf %4 : vector<128x32xbf16> to vector<128x32xf32>
    %c0_4 = arith.constant 0 : index
    %c0_5 = arith.constant 0 : index
    %6 = vector.load %arg12[%c0_4, %c0_5] : memref<8x32xf32, #tpu.memory_space<vmem>>, vector<8x32xf32>
    %cst = arith.constant dense<0.000000e+00> : vector<8x32xf32>
    %7 = tpu.matmul %3, %5, %cst {dimension_numbers = #tpu.dot_dimension_numbers<[1], [0], [0], [1], [0, 0, 1, 1], [], []>} : vector<8x128xf32>, vector<128x32xf32>, vector<8x32xf32> -> vector<8x32xf32>
    %8 = arith.addf %6, %7 : vector<8x32xf32>
    %c0_6 = arith.constant 0 : index
    %c0_7 = arith.constant 0 : index
    %9 = vector.load %arg12[%c0_6, %c0_7] : memref<8x32xf32, #tpu.memory_space<vmem>>, vector<8x32xf32>
    tpu.vector_store %arg12[%c0_6, %c0_7], %8 {strides = array<i32>} : memref<8x32xf32, #tpu.memory_space<vmem>>, vector<8x32xf32>,
    %c3_i32 = arith.constant 3 : i32
    %10 = arith.cmpi eq, %arg1, %c3_i32 : i32
    %11 = arith.extui %10 : i1 to i32
    %c0_i32_8 = arith.constant 0 : i32
    %12 = arith.cmpi ne, %11, %c0_i32_8 : i32
    scf.if %12 {
      %c0_9 = arith.constant 0 : index
      %c0_10 = arith.constant 0 : index
      %13 = vector.load %arg12[%c0_9, %c0_10] : memref<8x32xf32, #tpu.memory_space<vmem>>, vector<8x32xf32>
      %c0_11 = arith.constant 0 : index
      %c0_12 = arith.constant 0 : index
      %14 = vector.load %arg4[%c0_11, %c0_12] : memref<1x32xf32, #tpu.memory_space<vmem>>, vector<1x32xf32>
      %15 = vector.broadcast %14 : vector<1x32xf32> to vector<8x32xf32>
      %16 = arith.addf %13, %15 : vector<8x32xf32>
      %17 = math.tanh %16 : vector<8x32xf32>
      %c0_13 = arith.constant 0 : index
      %c0_14 = arith.constant 0 : index
      %18 = vector.load %arg5[%c0_13, %c0_14] : memref<32x32xbf16, #tpu.memory_space<vmem>>, vector<32x32xbf16>
      %19 = arith.extf %18 : vector<32x32xbf16> to vector<32x32xf32>
      %cst_15 = arith.constant dense<0.000000e+00> : vector<8x32xf32>
      %20 = tpu.matmul %17, %19, %cst_15 {dimension_numbers = #tpu.dot_dimension_numbers<[1], [0], [0], [1], [0, 0, 1, 1], [], []>} : vector<8x32xf32>, vector<32x32xf32>, vector<8x32xf32> -> vector<8x32xf32>
      %c0_16 = arith.constant 0 : index
      %c0_17 = arith.constant 0 : index
      %21 = vector.load %arg6[%c0_16, %c0_17] : memref<1x32xf32, #tpu.memory_space<vmem>>, vector<1x32xf32>
      %22 = vector.broadcast %21 : vector<1x32xf32> to vector<8x32xf32>
      %23 = arith.addf %20, %22 : vector<8x32xf32>
      %24 = math.tanh %23 : vector<8x32xf32>
      %c0_18 = arith.constant 0 : index
      %c0_19 = arith.constant 0 : index
      %25 = vector.load %arg7[%c0_18, %c0_19] : memref<32x32xbf16, #tpu.memory_space<vmem>>, vector<32x32xbf16>
      %26 = arith.extf %25 : vector<32x32xbf16> to vector<32x32xf32>
      %cst_20 = arith.constant dense<0.000000e+00> : vector<8x32xf32>
      %27 = tpu.matmul %24, %26, %cst_20 {dimension_numbers = #tpu.dot_dimension_numbers<[1], [0], [0], [1], [0, 0, 1, 1], [], []>} : vector<8x32xf32>, vector<32x32xf32>, vector<8x32xf32> -> vector<8x32xf32>
      %c0_21 = arith.constant 0 : index
      %c0_22 = arith.constant 0 : index
      %28 = vector.load %arg8[%c0_21, %c0_22] : memref<1x32xf32, #tpu.memory_space<vmem>>, vector<1x32xf32>
      %29 = vector.broadcast %28 : vector<1x32xf32> to vector<8x32xf32>
      %30 = arith.addf %27, %29 : vector<8x32xf32>
      %31 = vector.extract_strided_slice %30 {offsets = [0, 0], sizes = [8, 16], strides = [1, 1]} : vector<8x32xf32> to vector<8x16xf32>
      %32 = vector.extract_strided_slice %30 {offsets = [0, 16], sizes = [8, 16], strides = [1, 1]} : vector<8x32xf32> to vector<8x16xf32>
      %33 = math.exp %32 : vector<8x16xf32>
      %c0_23 = arith.constant 0 : index
      %c0_24 = arith.constant 0 : index
      %c0_25 = arith.constant 0 : index
      %34 = vector.load %arg9[%c0_23, %c0_24, %c0_25] : memref<2x8x16xf32, #tpu.memory_space<vmem>>, vector<1x8x16xf32>
      %35 = vector.shape_cast %34 : vector<1x8x16xf32> to vector<8x16xf32>
      %36 = arith.mulf %33, %35 : vector<8x16xf32>
      %37 = arith.addf %36, %31 : vector<8x16xf32>
      %c1 = arith.constant 1 : index
      %c0_26 = arith.constant 0 : index
      %c0_27 = arith.constant 0 : index
      %38 = vector.load %arg9[%c1, %c0_26, %c0_27] : memref<2x8x16xf32, #tpu.memory_space<vmem>>, vector<1x8x16xf32>
      %39 = vector.shape_cast %38 : vector<1x8x16xf32> to vector<8x16xf32>
      %40 = arith.mulf %33, %39 : vector<8x16xf32>
      %41 = arith.addf %40, %31 : vector<8x16xf32>
      %42 = tpu.concatenate %37, %41 in 0 : vector<8x16xf32>, vector<8x16xf32> -> vector<16x16xf32>
      %c0_28 = arith.constant 0 : index
      %c0_29 = arith.constant 0 : index
      %c0_30 = arith.constant 0 : index
      %43 = vector.load %arg10[%c0_28, %c0_29, %c0_30] : memref<1x16x16xf32, #tpu.memory_space<vmem>>, vector<1x16x16xf32>
      %44 = vector.shape_cast %43 : vector<1x16x16xf32> to vector<16x16xf32>
      %45 = vector.shape_cast %42 : vector<16x16xf32> to vector<1x16x16xf32>
      tpu.vector_store %arg10[%c0_28, %c0_29, %c0_30], %45 {strides = array<i32>} : memref<1x16x16xf32, #tpu.memory_space<vmem>>, vector<1x16x16xf32>,
      %46 = arith.mulf %31, %31 : vector<8x16xf32>
      %cst_31 = arith.constant 1.000000e+00 : f32
      %47 = vector.broadcast %cst_31 : f32 to vector<8x16xf32>
      %48 = arith.subf %47, %46 : vector<8x16xf32>
      %cst_32 = arith.constant 2.000000e+00 : f32
      %49 = vector.broadcast %cst_32 : f32 to vector<8x16xf32>
      %50 = arith.mulf %49, %32 : vector<8x16xf32>
      %51 = arith.addf %48, %50 : vector<8x16xf32>
      %52 = arith.mulf %33, %33 : vector<8x16xf32>
      %53 = arith.subf %51, %52 : vector<8x16xf32>
      %cst_33 = arith.constant dense<0.000000e+00> : vector<8xf32>
      %54 = vector.multi_reduction <add>, %53, %cst_33 [1] : vector<8x16xf32> to vector<8xf32>
      %55 = vector.shape_cast %54 : vector<8xf32> to vector<8x1xf32>
      %cst_34 = arith.constant -5.000000e-01 : f32
      %56 = vector.broadcast %cst_34 : f32 to vector<8x1xf32>
      %57 = arith.mulf %56, %55 : vector<8x1xf32>
      %c0_35 = arith.constant 0 : index
      %c0_36 = arith.constant 0 : index
      %58 = vector.load %arg11[%c0_35, %c0_36] : memref<8x1xf32, #tpu.memory_space<vmem>>, vector<8x1xf32>
      tpu.vector_store %arg11[%c0_35, %c0_36], %57 {strides = array<i32>} : memref<8x1xf32, #tpu.memory_space<vmem>>, vector<8x1xf32>,
    } else {
    }
    return
  }
  func.func @transform_0(%arg0: i32, %arg1: i32) -> (i32, i32) {
    %c0_i32 = arith.constant 0 : i32
    return %arg0, %arg1 : i32, i32
  }
  func.func @transform_1(%arg0: i32, %arg1: i32) -> (i32, i32) {
    %c0_i32 = arith.constant 0 : i32
    %c0_i32_0 = arith.constant 0 : i32
    return %arg1, %c0_i32 : i32, i32
  }
  func.func @transform_2(%arg0: i32, %arg1: i32) -> (i32, i32) {
    %c0_i32 = arith.constant 0 : i32
    %c0_i32_0 = arith.constant 0 : i32
    %c0_i32_1 = arith.constant 0 : i32
    return %c0_i32, %c0_i32_0 : i32, i32
  }
  func.func @transform_3(%arg0: i32, %arg1: i32) -> (i32, i32) {
    %c0_i32 = arith.constant 0 : i32
    %c0_i32_0 = arith.constant 0 : i32
    %c0_i32_1 = arith.constant 0 : i32
    return %c0_i32, %c0_i32_0 : i32, i32
  }
  func.func @transform_4(%arg0: i32, %arg1: i32) -> (i32, i32) {
    %c0_i32 = arith.constant 0 : i32
    %c0_i32_0 = arith.constant 0 : i32
    %c0_i32_1 = arith.constant 0 : i32
    return %c0_i32, %c0_i32_0 : i32, i32
  }
  func.func @transform_5(%arg0: i32, %arg1: i32) -> (i32, i32) {
    %c0_i32 = arith.constant 0 : i32
    %c0_i32_0 = arith.constant 0 : i32
    %c0_i32_1 = arith.constant 0 : i32
    return %c0_i32, %c0_i32_0 : i32, i32
  }
  func.func @transform_6(%arg0: i32, %arg1: i32) -> (i32, i32) {
    %c0_i32 = arith.constant 0 : i32
    %c0_i32_0 = arith.constant 0 : i32
    %c0_i32_1 = arith.constant 0 : i32
    return %c0_i32, %c0_i32_0 : i32, i32
  }
  func.func @transform_7(%arg0: i32, %arg1: i32) -> (i32, i32, i32) {
    %c0_i32 = arith.constant 0 : i32
    %c0_i32_0 = arith.constant 0 : i32
    %c0_i32_1 = arith.constant 0 : i32
    return %c0_i32, %arg0, %c0_i32_0 : i32, i32, i32
  }
  func.func @transform_8(%arg0: i32, %arg1: i32) -> (i32, i32, i32) {
    %c0_i32 = arith.constant 0 : i32
    %c0_i32_0 = arith.constant 0 : i32
    %c0_i32_1 = arith.constant 0 : i32
    return %arg0, %c0_i32, %c0_i32_0 : i32, i32, i32
  }
  func.func @transform_9(%arg0: i32, %arg1: i32) -> (i32, i32) {
    %c0_i32 = arith.constant 0 : i32
    %c0_i32_0 = arith.constant 0 : i32
    return %arg0, %c0_i32 : i32, i32
  }
}

</mosaic_0001>

<llo_original>
// kernel: tpu_custom_call.1
$region0: #{tpu_custom_call.1}
  #allocation0 [shape = 'u32[]', space=smem, size = 0x4, offset = 0x4, fixed_abs, tag = 'smem constant byte address 0x4 - core index']
  #allocation1 [shape = 'u32[144,128]{1,0:T(1,128)}', space=vmem, size = 0x12000, scoped, tag = 'internal scratch']
  #allocation2 [shape = 'f32[8,32]{1,0:T(8,128)}', space=vmem, size = 0x1000, scoped, tag = 'scratch operand']
  %s0 = inlined_call_operand.vmem [shape: f32[8,512], index: 0, kind: input, shape index: {}]
  %s1 = inlined_call_operand.vmem [shape: bf16[512,32], index: 1, kind: input, shape index: {}]
  %s2 = inlined_call_operand.vmem [shape: f32[1,32], index: 2, kind: input, shape index: {}]
  %s3 = inlined_call_operand.vmem [shape: bf16[32,32], index: 3, kind: input, shape index: {}]
  %s4 = inlined_call_operand.vmem [shape: f32[1,32], index: 4, kind: input, shape index: {}]
  %s5 = inlined_call_operand.vmem [shape: bf16[32,32], index: 5, kind: input, shape index: {}]
  %s6 = inlined_call_operand.vmem [shape: f32[1,32], index: 6, kind: input, shape index: {}]
  %s7 = inlined_call_operand.vmem [shape: f32[2,8,16], index: 7, kind: input, shape index: {}]
  %s8 = inlined_call_operand.hbm [shape: f32[1,16,16], index: 8, kind: output, shape index: {0}]
  %s9 = inlined_call_operand.vmem [shape: f32[8,1], index: 9, kind: output, shape index: {1}]
  %10 = xla_tuple %s8, %s9
  %s11 = sld [smem:[#allocation0]]
  $region81: #{tpu_custom_call.1} parent=0
    _
  %s13 = ssub.s32 1, %s11
  %s14 = scalar_select 0, %s13, %s11
  $region1: #{tpu_custom_call.1} parent=0
    #allocation3 [shape = 'u8[8192]{0}', space=vmem, size = 0x2000, scoped, tag = 'output window, operand 0, single buffered']
    #allocation4 [shape = 's32[2]{0}', space=sflag, size = 0x8, scoped, tag = 'scoped memory for tpu_custom_call.1']
    %15 = vsyncpa [#allocation4], 0
    loop: start=0, step=1, limit=6
    $region2: #{tpu_custom_call.1} parent=1 // loop_pre_header
      _
    $region3: #{tpu_custom_call.1} parent=1 // loop_header
      %s17 = sphi 0, %s21
      %p18 = scmp.ge.s32.totalorder %s17, 6
      %s24 = sphi 0, %s36
      %s25 = sphi 0, %s32
      %s26 = sphi 0, %s24
      %s27 = sphi 0, %s25
      %s28 = sphi 0, %s26
      %s29 = sphi 0, %s27
      %s41 = sphi 0, %s43
      %s44 = sphi 0, %s41
      %s45 = sphi 0, %s44
      %s61 = sphi 0, %s45
      %s67 = sphi 0, %s69
      %s70 = sphi 0, %s67
      %s71 = sphi 0, %s70
      %s87 = sphi 0, %s71
      %s91 = sphi 0, %s91
      %s93 = sphi 0, %s91
      %s94 = sphi 0, %s93
      %s108 = sphi 0, %s94
      %s112 = sphi 0, %s112
      %s114 = sphi 0, %s112
      %s115 = sphi 0, %s114
      %s129 = sphi 0, %s115
      %s133 = sphi 0, %s133
      %s135 = sphi 0, %s133
      %s136 = sphi 0, %s135
      %s150 = sphi 0, %s136
      %s154 = sphi 0, %s154
      %s156 = sphi 0, %s154
      %s157 = sphi 0, %s156
      %s171 = sphi 0, %s157
      %s175 = sphi 0, %s175
      %s177 = sphi 0, %s175
      %s178 = sphi 0, %s177
      %s192 = sphi 0, %s178
      %s198 = sphi 0, %s200
      %s201 = sphi 0, %s198
      %s202 = sphi 0, %s201
      %s218 = sphi 0, %s202
      %s224 = sphi 0, %s226
      %s227 = sphi 0, %s224
      %s228 = sphi 0, %s227
      %s244 = sphi 0, %s228
      %s250 = sphi 0, %s252
      %s253 = sphi 0, %s250
      %s254 = sphi 0, %s253
      %s270 = sphi 0, %s254
    $region4: #{tpu_custom_call.1} parent=1 // loop_header_branch
      %20 = sbr.rel (%p18) target = $region8
    $region5: #{tpu_custom_call.1} parent=1 // loop_body
      %s22 = ssub.s32 %s17, 1
      %s23 = ssub.s32 %s17, 2
      %s30 = sadd.s32 1, %s25
      %p31 = scmp.ge.s32.totalorder %s30, 4
      %s32 = scalar_select %p31, 0, %s30
      %s33 = sadd.s32 1, %s24
      %s34 = scalar_select %p31, %s33, %s24
      %p35 = scmp.ge.s32.totalorder %s34, 1
      %s36 = scalar_select %p35, 0, %s34
      %s37 = ssub.s32 %s24, %s36
      %s38 = ssub.s32 %s25, %s32
      %s39 = sor.u32 %s37, %s38
      %p40 = scmp.eq.s32.totalorder %s39, 0
      %s42 = sadd.s32 %s41, 1
      %s43 = scalar_select %p40, %s41, %s42
      %p46 = pneg %p40
      %p47 = scmp.eq.s32.totalorder %s17, 3
      %p48 = por %p46, %p47
      %p49 = scmp.ne.s32.totalorder %s41, %s44
      %p50 = scmp.eq.s32.totalorder %s17, 0
      %p51 = por %p49, %p50
      %p52 = scmp.ne.s32.totalorder %s41, %s44
      %p53 = scmp.eq.s32.totalorder %s22, 3
      %p54 = por %p52, %p53
      %p55 = scmp.ne.s32.totalorder %s44, %s45
      %p56 = scmp.eq.s32.totalorder %s22, 0
      %p57 = por %p55, %p56
      %p58 = scmp.ne.s32.totalorder %s44, %s45
      %p59 = scmp.eq.s32.totalorder %s23, 3
      %p60 = por %p58, %p59
      %p62 = scmp.ne.s32.totalorder %s45, %s61
      %p63 = scmp.eq.s32.totalorder %s23, 0
      %p64 = por %p62, %p63
      %s65 = ssub.s32 %s25, %s32
      %p66 = scmp.eq.s32.totalorder %s65, 0
      %s68 = sadd.s32 %s67, 1
      %s69 = scalar_select %p66, %s67, %s68
      %p72 = pneg %p66
      %p73 = scmp.eq.s32.totalorder %s17, 3
      %p74 = por %p72, %p73
      %p75 = scmp.ne.s32.totalorder %s67, %s70
      %p76 = scmp.eq.s32.totalorder %s17, 0
      %p77 = por %p75, %p76
      %p78 = scmp.ne.s32.totalorder %s67, %s70
      %p79 = scmp.eq.s32.totalorder %s22, 3
      %p80 = por %p78, %p79
      %p81 = scmp.ne.s32.totalorder %s70, %s71
      %p82 = scmp.eq.s32.totalorder %s22, 0
      %p83 = por %p81, %p82
      %p84 = scmp.ne.s32.totalorder %s70, %s71
      %p85 = scmp.eq.s32.totalorder %s23, 3
      %p86 = por %p84, %p85
      %p88 = scmp.ne.s32.totalorder %s71, %s87
      %p89 = scmp.eq.s32.totalorder %s23, 0
      %p90 = por %p88, %p89
      %s92 = sadd.s32 %s91, 1
      %p95 = scmp.eq.s32.totalorder %s17, 3
      %p96 = scmp.ne.s32.totalorder %s91, %s93
      %p97 = scmp.eq.s32.totalorder %s17, 0
      %p98 = por %p96, %p97
      %p99 = scmp.ne.s32.totalorder %s91, %s93
      %p100 = scmp.eq.s32.totalorder %s22, 3
      %p101 = por %p99, %p100
      %p102 = scmp.ne.s32.totalorder %s93, %s94
      %p103 = scmp.eq.s32.totalorder %s22, 0
      %p104 = por %p102, %p103
      %p105 = scmp.ne.s32.totalorder %s93, %s94
      %p106 = scmp.eq.s32.totalorder %s23, 3
      %p107 = por %p105, %p106
      %p109 = scmp.ne.s32.totalorder %s94, %s108
      %p110 = scmp.eq.s32.totalorder %s23, 0
      %p111 = por %p109, %p110
      %s113 = sadd.s32 %s112, 1
      %p116 = scmp.eq.s32.totalorder %s17, 3
      %p117 = scmp.ne.s32.totalorder %s112, %s114
      %p118 = scmp.eq.s32.totalorder %s17, 0
      %p119 = por %p117, %p118
      %p120 = scmp.ne.s32.totalorder %s112, %s114
      %p121 = scmp.eq.s32.totalorder %s22, 3
      %p122 = por %p120, %p121
      %p123 = scmp.ne.s32.totalorder %s114, %s115
      %p124 = scmp.eq.s32.totalorder %s22, 0
      %p125 = por %p123, %p124
      %p126 = scmp.ne.s32.totalorder %s114, %s115
      %p127 = scmp.eq.s32.totalorder %s23, 3
      %p128 = por %p126, %p127
      %p130 = scmp.ne.s32.totalorder %s115, %s129
      %p131 = scmp.eq.s32.totalorder %s23, 0
      %p132 = por %p130, %p131
      %s134 = sadd.s32 %s133, 1
      %p137 = scmp.eq.s32.totalorder %s17, 3
      %p138 = scmp.ne.s32.totalorder %s133, %s135
      %p139 = scmp.eq.s32.totalorder %s17, 0
      %p140 = por %p138, %p139
      %p141 = scmp.ne.s32.totalorder %s133, %s135
      %p142 = scmp.eq.s32.totalorder %s22, 3
      %p143 = por %p141, %p142
      %p144 = scmp.ne.s32.totalorder %s135, %s136
      %p145 = scmp.eq.s32.totalorder %s22, 0
      %p146 = por %p144, %p145
      %p147 = scmp.ne.s32.totalorder %s135, %s136
      %p148 = scmp.eq.s32.totalorder %s23, 3
      %p149 = por %p147, %p148
      %p151 = scmp.ne.s32.totalorder %s136, %s150
      %p152 = scmp.eq.s32.totalorder %s23, 0
      %p153 = por %p151, %p152
      %s155 = sadd.s32 %s154, 1
      %p158 = scmp.eq.s32.totalorder %s17, 3
      %p159 = scmp.ne.s32.totalorder %s154, %s156
      %p160 = scmp.eq.s32.totalorder %s17, 0
      %p161 = por %p159, %p160
      %p162 = scmp.ne.s32.totalorder %s154, %s156
      %p163 = scmp.eq.s32.totalorder %s22, 3
      %p164 = por %p162, %p163
      %p165 = scmp.ne.s32.totalorder %s156, %s157
      %p166 = scmp.eq.s32.totalorder %s22, 0
      %p167 = por %p165, %p166
      %p168 = scmp.ne.s32.totalorder %s156, %s157
      %p169 = scmp.eq.s32.totalorder %s23, 3
      %p170 = por %p168, %p169
      %p172 = scmp.ne.s32.totalorder %s157, %s171
      %p173 = scmp.eq.s32.totalorder %s23, 0
      %p174 = por %p172, %p173
      %s176 = sadd.s32 %s175, 1
      %p179 = scmp.eq.s32.totalorder %s17, 3
      %p180 = scmp.ne.s32.totalorder %s175, %s177
      %p181 = scmp.eq.s32.totalorder %s17, 0
      %p182 = por %p180, %p181
      %p183 = scmp.ne.s32.totalorder %s175, %s177
      %p184 = scmp.eq.s32.totalorder %s22, 3
      %p185 = por %p183, %p184
      %p186 = scmp.ne.s32.totalorder %s177, %s178
      %p187 = scmp.eq.s32.totalorder %s22, 0
      %p188 = por %p186, %p187
      %p189 = scmp.ne.s32.totalorder %s177, %s178
      %p190 = scmp.eq.s32.totalorder %s23, 3
      %p191 = por %p189, %p190
      %p193 = scmp.ne.s32.totalorder %s178, %s192
      %p194 = scmp.eq.s32.totalorder %s23, 0
      %p195 = por %p193, %p194
      %s196 = ssub.s32 %s24, %s36
      %p197 = scmp.eq.s32.totalorder %s196, 0
      %s199 = sadd.s32 %s198, 1
      %s200 = scalar_select %p197, %s198, %s199
      %p203 = pneg %p197
      %p204 = scmp.eq.s32.totalorder %s17, 3
      %p205 = por %p203, %p204
      %p206 = scmp.ne.s32.totalorder %s198, %s201
      %p207 = scmp.eq.s32.totalorder %s17, 0
      %p208 = por %p206, %p207
      %p209 = scmp.ne.s32.totalorder %s198, %s201
      %p210 = scmp.eq.s32.totalorder %s22, 3
      %p211 = por %p209, %p210
      %p212 = scmp.ne.s32.totalorder %s201, %s202
      %p213 = scmp.eq.s32.totalorder %s22, 0
      %p214 = por %p212, %p213
      %p215 = scmp.ne.s32.totalorder %s201, %s202
      %p216 = scmp.eq.s32.totalorder %s23, 3
      %p217 = por %p215, %p216
      %p219 = scmp.ne.s32.totalorder %s202, %s218
      %p220 = scmp.eq.s32.totalorder %s23, 0
      %p221 = por %p219, %p220
      %s222 = ssub.s32 %s24, %s36
      %p223 = scmp.eq.s32.totalorder %s222, 0
      %s225 = sadd.s32 %s224, 1
      %s226 = scalar_select %p223, %s224, %s225
      %p229 = pneg %p223
      %p230 = scmp.eq.s32.totalorder %s17, 3
      %p231 = por %p229, %p230
      %p232 = scmp.ne.s32.totalorder %s224, %s227
      %p233 = scmp.eq.s32.totalorder %s17, 0
      %p234 = por %p232, %p233
      %p235 = scmp.ne.s32.totalorder %s224, %s227
      %p236 = scmp.eq.s32.totalorder %s22, 3
      %p237 = por %p235, %p236
      %p238 = scmp.ne.s32.totalorder %s227, %s228
      %p239 = scmp.eq.s32.totalorder %s22, 0
      %p240 = por %p238, %p239
      %p241 = scmp.ne.s32.totalorder %s227, %s228
      %p242 = scmp.eq.s32.totalorder %s23, 3
      %p243 = por %p241, %p242
      %p245 = scmp.ne.s32.totalorder %s228, %s244
      %p246 = scmp.eq.s32.totalorder %s23, 0
      %p247 = por %p245, %p246
      %s248 = ssub.s32 %s24, %s36
      %p249 = scmp.eq.s32.totalorder %s248, 0
      %s251 = sadd.s32 %s250, 1
      %s252 = scalar_select %p249, %s250, %s251
      %p255 = pneg %p249
      %p256 = scmp.eq.s32.totalorder %s17, 3
      %p257 = por %p255, %p256
      %p258 = scmp.ne.s32.totalorder %s250, %s253
      %p259 = scmp.eq.s32.totalorder %s17, 0
      %p260 = por %p258, %p259
      %p261 = scmp.ne.s32.totalorder %s250, %s253
      %p262 = scmp.eq.s32.totalorder %s22, 3
      %p263 = por %p261, %p262
      %p264 = scmp.ne.s32.totalorder %s253, %s254
      %p265 = scmp.eq.s32.totalorder %s22, 0
      %p266 = por %p264, %p265
      %p267 = scmp.ne.s32.totalorder %s253, %s254
      %p268 = scmp.eq.s32.totalorder %s23, 3
      %p269 = por %p267, %p268
      %p271 = scmp.ne.s32.totalorder %s254, %s270
      %p272 = scmp.eq.s32.totalorder %s23, 0
      %p273 = por %p271, %p272
      %p274 = scmp.le.s32.totalorder 1, %s17
      %p275 = scmp.lt.s32.totalorder %s17, 5
      %p276 = pnand %p274, %p275
      %p277 = pneg %p276
      // Predicated region
      $region9: #{tpu_custom_call.1} parent=5 // pred_check
        _
      $region10: #{tpu_custom_call.1} parent=5 // pred_check_branch
        %279 = sbr.rel (%p276) target = $region12
      $region11: #{tpu_custom_call.1} parent=5 // pred_region
        %s280 = ssub.s32 %s17, 1
        // Predicated region
        $region13: #{tpu_custom_call.1} parent=11 // pred_check
          %p281 = pneg %p104
        $region14: #{tpu_custom_call.1} parent=11 // pred_check_branch
          %283 = sbr.rel (%p281) target = $region16
        $region15: #{tpu_custom_call.1} parent=11 // pred_region
          _
        $region16: #{tpu_custom_call.1} parent=11 // pred_fallthru
          _
        // Predicated region
        $region17: #{tpu_custom_call.1} parent=11 // pred_check
          %p284 = pneg %p125
        $region18: #{tpu_custom_call.1} parent=11 // pred_check_branch
          %286 = sbr.rel (%p284) target = $region20
        $region19: #{tpu_custom_call.1} parent=11 // pred_region
          _
        $region20: #{tpu_custom_call.1} parent=11 // pred_fallthru
          _
        // Predicated region
        $region21: #{tpu_custom_call.1} parent=11 // pred_check
          %p287 = pneg %p146
        $region22: #{tpu_custom_call.1} parent=11 // pred_check_branch
          %289 = sbr.rel (%p287) target = $region24
        $region23: #{tpu_custom_call.1} parent=11 // pred_region
          _
        $region24: #{tpu_custom_call.1} parent=11 // pred_fallthru
          _
        // Predicated region
        $region25: #{tpu_custom_call.1} parent=11 // pred_check
          %p290 = pneg %p167
        $region26: #{tpu_custom_call.1} parent=11 // pred_check_branch
          %292 = sbr.rel (%p290) target = $region28
        $region27: #{tpu_custom_call.1} parent=11 // pred_region
          _
        $region28: #{tpu_custom_call.1} parent=11 // pred_fallthru
          _
        // Predicated region
        $region29: #{tpu_custom_call.1} parent=11 // pred_check
          %p293 = pneg %p188
        $region30: #{tpu_custom_call.1} parent=11 // pred_check_branch
          %295 = sbr.rel (%p293) target = $region32
        $region31: #{tpu_custom_call.1} parent=11 // pred_region
          _
        $region32: #{tpu_custom_call.1} parent=11 // pred_fallthru
          _
        // Predicated region
        $region33: #{tpu_custom_call.1} parent=11 // pred_check
          %p296 = pneg %p214
        $region34: #{tpu_custom_call.1} parent=11 // pred_check_branch
          %298 = sbr.rel (%p296) target = $region36
        $region35: #{tpu_custom_call.1} parent=11 // pred_region
          %p299 = scmp.lt.s32.totalorder %s26, 0
          %s300 = scalar_select %p299, %s26, 0
          %s301 = smul.addr %s300, 8
          %s302 = scalar_lea.vmem %s7, %s301
        $region36: #{tpu_custom_call.1} parent=11 // pred_fallthru
          _
      $region12: #{tpu_custom_call.1} parent=5 // pred_fallthru
        _
      %p303 = scmp.lt.s32.totalorder %s17, 4
      // Predicated region
      $region37: #{tpu_custom_call.1} parent=5 // pred_check
        %p304 = pneg %p303
      $region38: #{tpu_custom_call.1} parent=5 // pred_check_branch
        %306 = sbr.rel (%p304) target = $region40
      $region39: #{tpu_custom_call.1} parent=5 // pred_region
        // Predicated region
        $region41: #{tpu_custom_call.1} parent=39 // pred_check
          %p307 = pneg %p51
        $region42: #{tpu_custom_call.1} parent=39 // pred_check_branch
          %309 = sbr.rel (%p307) target = $region44
        $region43: #{tpu_custom_call.1} parent=39 // pred_region
          %p310 = scmp.lt.s32.totalorder %s24, 0
          %s311 = scalar_select %p310, %s24, 0
          %p312 = scmp.lt.s32.totalorder %s25, 3
          %s313 = scalar_select %p312, %s25, 3
          %s314 = smul.addr %s311, 4
          %s315 = sadd.s32 %s313, %s314
          %s316 = smul.addr %s315, 8
          %s317 = scalar_lea.vmem %s0, %s316
        $region44: #{tpu_custom_call.1} parent=39 // pred_fallthru
          _
        // Predicated region
        $region45: #{tpu_custom_call.1} parent=39 // pred_check
          %p318 = pneg %p77
        $region46: #{tpu_custom_call.1} parent=39 // pred_check_branch
          %320 = sbr.rel (%p318) target = $region48
        $region47: #{tpu_custom_call.1} parent=39 // pred_region
          %s321 = smul.u32 16, %s25
          %p322 = scmp.lt.s32.totalorder %s321, 63
          %s323 = scalar_select %p322, %s321, 63
          %s324 = smul.addr %s323, 4
          %s325 = scalar_lea.vmem %s1, %s324
          %s326 = smul.u32 16, %s25
        $region48: #{tpu_custom_call.1} parent=39 // pred_fallthru
          _
      $region40: #{tpu_custom_call.1} parent=5 // pred_fallthru
        _
      %p327 = scmp.le.s32.totalorder 1, %s17
      %p328 = scmp.lt.s32.totalorder %s17, 5
      %p329 = pnand %p327, %p328
      %p330 = pneg %p329
      // Predicated region
      $region49: #{tpu_custom_call.1} parent=5 // pred_check
        _
      $region50: #{tpu_custom_call.1} parent=5 // pred_check_branch
        %332 = sbr.rel (%p329) target = $region52
      $region51: #{tpu_custom_call.1} parent=5 // pred_region
        %s333 = ssub.s32 %s17, 1
        %p334 = scmp.lt.s32.totalorder %s26, 0
        %s335 = scalar_select %p334, %s26, 0
        %p336 = scmp.lt.s32.totalorder %s27, 3
        %s337 = scalar_select %p336, %s27, 3
        %s338 = smul.addr %s335, 4
        %s339 = sadd.s32 %s337, %s338
        %s340 = smul.addr %s339, 8
        %s341 = scalar_lea.vmem %s0, %s340
        %p342 = pneg %p57
        %p343 = pneg %p54
        %s344 = smul.u32 16, %s27
        %p345 = scmp.lt.s32.totalorder %s344, 63
        %s346 = scalar_select %p345, %s344, 63
        %s347 = smul.addr %s346, 4
        %s348 = scalar_lea.vmem %s1, %s347
        %p349 = pneg %p83
        %p350 = pneg %p80
        %p351 = pneg %p104
        %p352 = pneg %p101
        %p353 = pneg %p125
        %p354 = pneg %p122
        %p355 = pneg %p146
        %p356 = pneg %p143
        %p357 = pneg %p167
        %p358 = pneg %p164
        %p359 = pneg %p188
        %p360 = pneg %p185
        %p361 = scmp.lt.s32.totalorder %s26, 0
        %s362 = scalar_select %p361, %s26, 0
        %s363 = smul.addr %s362, 8
        %s364 = scalar_lea.vmem %s7, %s363
        %p365 = pneg %p214
        %p366 = pneg %p211
        %p367 = pneg %p240
        %p368 = pneg %p237
        %p369 = pneg %p266
        %p370 = pneg %p263
        %p371 = scmp.lt.s32.totalorder %s26, 0
        %s372 = scalar_select %p371, %s26, 0
        %s373 = smul.addr %s372, 8
        %s374 = scalar_lea.vmem %s9, %s373
        %p375 = scmp.lt.s32.totalorder %s26, 0
        %s376 = scalar_select %p375, %s26, 0
        %p377 = scmp.lt.s32.totalorder %s27, 3
        %s378 = scalar_select %p377, %s27, 3
        %s379 = smul.addr %s376, 4
        %s380 = sadd.s32 %s378, %s379
        %s381 = smul.addr %s380, 8
        %s382 = scalar_lea.vmem %s0, %s381
        %s383 = smul.u32 16, %s27
        %p384 = scmp.lt.s32.totalorder %s383, 63
        %s385 = scalar_select %p384, %s383, 63
        %s386 = smul.addr %s385, 4
        %s387 = scalar_lea.vmem %s1, %s386
        %s388 = smul.u32 16, %s27
        %p389 = scmp.lt.s32.totalorder %s26, 0
        %s390 = scalar_select %p389, %s26, 0
        %s391 = smul.addr %s390, 8
        %s392 = scalar_lea.vmem %s7, %s391
        %p393 = scmp.lt.s32.totalorder %s26, 0
        %s394 = scalar_select %p393, %s26, 0
        %s395 = smul.addr %s394, 8
        %s396 = scalar_lea.vmem %s9, %s395
        %p397 = scmp.eq.s32.totalorder %s27, 0
        // Predicated region
        $region53: #{tpu_custom_call.1} parent=51 // pred_check
          %p398 = pneg %p397
        $region54: #{tpu_custom_call.1} parent=51 // pred_check_branch
          %400 = sbr.rel (%p398) target = $region56
        $region55: #{tpu_custom_call.1} parent=51 // pred_region
          %vm401 = vcmask 261120
          %402 = vst.msk [vmem:[#allocation2] sm:$0xff] %vm401, 0.0
        $region56: #{tpu_custom_call.1} parent=51 // pred_fallthru
          _
        %v403 = vld [vmem:[%s382] sm:$0xff]
        %v404 = vld [vmem:[%s387] sm:$0xf]
        %v405 = vld [vmem:[%s387 + $0x4] sm:$0xf]
        %v406 = vld [vmem:[%s387 + $0x8] sm:$0xf]
        %v407 = vld [vmem:[%s387 + $0xc] sm:$0xf]
        %v408 = vld [vmem:[%s387 + $0x10] sm:$0xf]
        %v409 = vld [vmem:[%s387 + $0x14] sm:$0xf]
        %v410 = vld [vmem:[%s387 + $0x18] sm:$0xf]
        %v411 = vld [vmem:[%s387 + $0x1c] sm:$0xf]
        %v412 = vld [vmem:[%s387 + $0x20] sm:$0xf]
        %v413 = vld [vmem:[%s387 + $0x24] sm:$0xf]
        %v414 = vld [vmem:[%s387 + $0x28] sm:$0xf]
        %v415 = vld [vmem:[%s387 + $0x2c] sm:$0xf]
        %v416 = vld [vmem:[%s387 + $0x30] sm:$0xf]
        %v417 = vld [vmem:[%s387 + $0x34] sm:$0xf]
        %v418 = vld [vmem:[%s387 + $0x38] sm:$0xf]
        %v419 = vld [vmem:[%s387 + $0x3c] sm:$0xf]
        %v420 = vunpack.c.l.bf16 %v404
        %v421 = vunpack.c.l.bf16 %v405
        %v422 = vunpack.c.l.bf16 %v406
        %v423 = vunpack.c.l.bf16 %v407
        %v424 = vunpack.c.l.bf16 %v408
        %v425 = vunpack.c.l.bf16 %v409
        %v426 = vunpack.c.l.bf16 %v410
        %v427 = vunpack.c.l.bf16 %v411
        %v428 = vunpack.c.l.bf16 %v412
        %v429 = vunpack.c.l.bf16 %v413
        %v430 = vunpack.c.l.bf16 %v414
        %v431 = vunpack.c.l.bf16 %v415
        %v432 = vunpack.c.l.bf16 %v416
        %v433 = vunpack.c.l.bf16 %v417
        %v434 = vunpack.c.l.bf16 %v418
        %v435 = vunpack.c.l.bf16 %v419
        %v436 = vld [vmem:[#allocation2] sm:$0xff]
        %437 = vmatprep.subr.mxu0 0.0
        %438 = vmatpush1.msra.mxu0 %v420
        %439 = vmatprep.subr.mxu0 0.0
        %440 = vmatpush1.msra.mxu0 %v421
        %441 = vmatprep.subr.mxu0 0.0
        %442 = vmatpush1.msra.mxu0 %v422
        %443 = vmatprep.subr.mxu0 0.0
        %444 = vmatpush1.msra.mxu0 %v423
        %445 = vmatprep.subr.mxu0 0.0
        %446 = vmatpush1.msra.mxu0 %v424
        %447 = vmatprep.subr.mxu0 0.0
        %448 = vmatpush1.msra.mxu0 %v425
        %449 = vmatprep.subr.mxu0 0.0
        %450 = vmatpush1.msra.mxu0 %v426
        %451 = vmatprep.subr.mxu0 0.0
        %452 = vmatpush1.msra.mxu0 %v427
        %453 = vmatprep.subr.mxu0 0.0
        %454 = vmatpush1.msra.mxu0 %v428
        %455 = vmatprep.subr.mxu0 0.0
        %456 = vmatpush1.msra.mxu0 %v429
        %457 = vmatprep.subr.mxu0 0.0
        %458 = vmatpush1.msra.mxu0 %v430
        %459 = vmatprep.subr.mxu0 0.0
        %460 = vmatpush1.msra.mxu0 %v431
        %461 = vmatprep.subr.mxu0 0.0
        %462 = vmatpush1.msra.mxu0 %v432
        %463 = vmatprep.subr.mxu0 0.0
        %464 = vmatpush1.msra.mxu0 %v433
        %465 = vmatprep.subr.mxu0 0.0
        %466 = vmatpush1.msra.mxu0 %v434
        %467 = vmatprep.subr.mxu0 0.0
        %468 = vmatpush1.msra.mxu0 %v435
        %469 = vmatprep.subr.mxu0 0.0
        %470 = vmatpush1.msra.mxu0 0.0
        %471 = vmatprep.subr.mxu0 0.0
        %472 = vmatpush1.msra.mxu0 0.0
        %473 = vmatprep.subr.mxu0 0.0
        %474 = vmatpush1.msra.mxu0 0.0
        %475 = vmatprep.subr.mxu0 0.0
        %476 = vmatpush1.msra.mxu0 0.0
        %477 = vmatprep.subr.mxu0 0.0
        %478 = vmatpush1.msra.mxu0 0.0
        %479 = vmatprep.subr.mxu0 0.0
        %480 = vmatpush1.msra.mxu0 0.0
        %481 = vmatprep.subr.mxu0 0.0
        %482 = vmatpush1.msra.mxu0 0.0
        %483 = vmatprep.subr.mxu0 0.0
        %484 = vmatpush1.msra.mxu0 0.0
        %485 = vmatprep.subr.mxu0 0.0
        %486 = vmatpush1.msra.mxu0 0.0
        %487 = vmatprep.subr.mxu0 0.0
        %488 = vmatpush1.msra.mxu0 0.0
        %489 = vmatprep.subr.mxu0 0.0
        %490 = vmatpush1.msra.mxu0 0.0
        %491 = vmatprep.subr.mxu0 0.0
        %492 = vmatpush1.msra.mxu0 0.0
        %493 = vmatprep.subr.mxu0 0.0
        %494 = vmatpush1.msra.mxu0 0.0
        %495 = vmatprep.subr.mxu0 0.0
        %496 = vmatpush1.msra.mxu0 0.0
        %497 = vmatprep.subr.mxu0 0.0
        %498 = vmatpush1.msra.mxu0 0.0
        %499 = vmatprep.subr.mxu0 0.0
        %500 = vmatpush1.msra.mxu0 0.0
        %501 = vmatprep.mubr.f32.mxu0 0.0
        %502 = vmatmul.mubr.f32.gmra.mrb[0].mxu0 %v403
        %v503 = vpop.f32.mrb[0].mxu0
        %v504 = vadd.f32 0.0, %v503
        %v505 = vpop.f32.mrb[0].mxu0
        %506 = vdwg.mxu0
        %v507 = vadd.f32 %v436, %v504
        %vm508 = vcmask 261120
        %509 = vst.msk [vmem:[#allocation2] sm:$0xff] %vm508, %v507
        %p510 = scmp.eq.s32.totalorder %s27, 3
        // Predicated region
        $region57: #{tpu_custom_call.1} parent=51 // pred_check
          %p511 = pneg %p510
        $region58: #{tpu_custom_call.1} parent=51 // pred_check_branch
          %513 = sbr.rel (%p511) target = $region60
        $region59: #{tpu_custom_call.1} parent=51 // pred_region
          %v514 = vld [vmem:[#allocation2] sm:$0xff]
          %v515 = vld [vmem:[%s2] sm:$0x1]
          %v517 = vlaneseq
          %v518 = vshrl.u32 %v517, 7
          %v519 = vsub.s32 0, %v518
          %v520 = vrot.slane %v515, %v519
          %v522 = vadd.f32 %v514, %v520
          %v523 = vtanh.pop %v522
          %v524 = vld [vmem:[%s3] sm:$0xf]
          %v525 = vld [vmem:[%s3 + $0x4] sm:$0xf]
          %v526 = vld [vmem:[%s3 + $0x8] sm:$0xf]
          %v527 = vld [vmem:[%s3 + $0xc] sm:$0xf]
          %v528 = vunpack.c.l.bf16 %v524
          %v529 = vunpack.c.l.bf16 %v525
          %v530 = vunpack.c.l.bf16 %v526
          %v531 = vunpack.c.l.bf16 %v527
          %v532 = vld [vmem:[%s4] sm:$0x1]
          %v534 = vlaneseq
          %v535 = vshrl.u32 %v534, 7
          %v536 = vsub.s32 0, %v535
          %v537 = vrot.slane %v532, %v536
          %v540 = vsel %vm508, %v523, 0
          %542 = vmatprep.subr.mxu0 0.0
          %543 = vmatpush1.msra.mxu0 %v528
          %544 = vmatprep.subr.mxu0 0.0
          %545 = vmatpush1.msra.mxu0 %v529
          %546 = vmatprep.subr.mxu0 0.0
          %547 = vmatpush1.msra.mxu0 %v530
          %548 = vmatprep.subr.mxu0 0.0
          %549 = vmatpush1.msra.mxu0 %v531
          %550 = vmatprep.subr.mxu0 0.0
          %551 = vmatpush1.msra.mxu0 0.0
          %552 = vmatprep.subr.mxu0 0.0
          %553 = vmatpush1.msra.mxu0 0.0
          %554 = vmatprep.subr.mxu0 0.0
          %555 = vmatpush1.msra.mxu0 0.0
          %556 = vmatprep.subr.mxu0 0.0
          %557 = vmatpush1.msra.mxu0 0.0
          %558 = vmatprep.subr.mxu0 0.0
          %559 = vmatpush1.msra.mxu0 0.0
          %560 = vmatprep.subr.mxu0 0.0
          %561 = vmatpush1.msra.mxu0 0.0
          %562 = vmatprep.subr.mxu0 0.0
          %563 = vmatpush1.msra.mxu0 0.0
          %564 = vmatprep.subr.mxu0 0.0
          %565 = vmatpush1.msra.mxu0 0.0
          %566 = vmatprep.subr.mxu0 0.0
          %567 = vmatpush1.msra.mxu0 0.0
          %568 = vmatprep.subr.mxu0 0.0
          %569 = vmatpush1.msra.mxu0 0.0
          %570 = vmatprep.subr.mxu0 0.0
          %571 = vmatpush1.msra.mxu0 0.0
          %572 = vmatprep.subr.mxu0 0.0
          %573 = vmatpush1.msra.mxu0 0.0
          %574 = vmatprep.subr.mxu0 0.0
          %575 = vmatpush1.msra.mxu0 0.0
          %576 = vmatprep.subr.mxu0 0.0
          %577 = vmatpush1.msra.mxu0 0.0
          %578 = vmatprep.subr.mxu0 0.0
          %579 = vmatpush1.msra.mxu0 0.0
          %580 = vmatprep.subr.mxu0 0.0
          %581 = vmatpush1.msra.mxu0 0.0
          %582 = vmatprep.subr.mxu0 0.0
          %583 = vmatpush1.msra.mxu0 0.0
          %584 = vmatprep.subr.mxu0 0.0
          %585 = vmatpush1.msra.mxu0 0.0
          %586 = vmatprep.subr.mxu0 0.0
          %587 = vmatpush1.msra.mxu0 0.0
          %588 = vmatprep.subr.mxu0 0.0
          %589 = vmatpush1.msra.mxu0 0.0
          %590 = vmatprep.subr.mxu0 0.0
          %591 = vmatpush1.msra.mxu0 0.0
          %592 = vmatprep.subr.mxu0 0.0
          %593 = vmatpush1.msra.mxu0 0.0
          %594 = vmatprep.subr.mxu0 0.0
          %595 = vmatpush1.msra.mxu0 0.0
          %596 = vmatprep.subr.mxu0 0.0
          %597 = vmatpush1.msra.mxu0 0.0
          %598 = vmatprep.subr.mxu0 0.0
          %599 = vmatpush1.msra.mxu0 0.0
          %600 = vmatprep.subr.mxu0 0.0
          %601 = vmatpush1.msra.mxu0 0.0
          %602 = vmatprep.subr.mxu0 0.0
          %603 = vmatpush1.msra.mxu0 0.0
          %604 = vmatprep.subr.mxu0 0.0
          %605 = vmatpush1.msra.mxu0 0.0
          %606 = vmatprep.mubr.f32.mxu0 0.0
          %607 = vmatmul.mubr.f32.gmra.mrb[0].mxu0 %v540
          %v608 = vpop.f32.mrb[0].mxu0
          %v609 = vadd.f32 %v537, %v608
          %v610 = vpop.f32.mrb[0].mxu0
          %611 = vdwg.mxu0
          %v612 = vtanh.pop %v609
          %v613 = vld [vmem:[%s5] sm:$0xf]
          %v614 = vld [vmem:[%s5 + $0x4] sm:$0xf]
          %v615 = vld [vmem:[%s5 + $0x8] sm:$0xf]
          %v616 = vld [vmem:[%s5 + $0xc] sm:$0xf]
          %v617 = vunpack.c.l.bf16 %v613
          %v618 = vunpack.c.l.bf16 %v614
          %v619 = vunpack.c.l.bf16 %v615
          %v620 = vunpack.c.l.bf16 %v616
          %v621 = vld [vmem:[%s6] sm:$0x1]
          %v623 = vlaneseq
          %v624 = vshrl.u32 %v623, 7
          %v625 = vsub.s32 0, %v624
          %v626 = vrot.slane %v621, %v625
          %v629 = vsel %vm508, %v612, 0
          %631 = vmatprep.subr.mxu0 0.0
          %632 = vmatpush1.msra.mxu0 %v617
          %633 = vmatprep.subr.mxu0 0.0
          %634 = vmatpush1.msra.mxu0 %v618
          %635 = vmatprep.subr.mxu0 0.0
          %636 = vmatpush1.msra.mxu0 %v619
          %637 = vmatprep.subr.mxu0 0.0
          %638 = vmatpush1.msra.mxu0 %v620
          %639 = vmatprep.subr.mxu0 0.0
          %640 = vmatpush1.msra.mxu0 0.0
          %641 = vmatprep.subr.mxu0 0.0
          %642 = vmatpush1.msra.mxu0 0.0
          %643 = vmatprep.subr.mxu0 0.0
          %644 = vmatpush1.msra.mxu0 0.0
          %645 = vmatprep.subr.mxu0 0.0
          %646 = vmatpush1.msra.mxu0 0.0
          %647 = vmatprep.subr.mxu0 0.0
          %648 = vmatpush1.msra.mxu0 0.0
          %649 = vmatprep.subr.mxu0 0.0
          %650 = vmatpush1.msra.mxu0 0.0
          %651 = vmatprep.subr.mxu0 0.0
          %652 = vmatpush1.msra.mxu0 0.0
          %653 = vmatprep.subr.mxu0 0.0
          %654 = vmatpush1.msra.mxu0 0.0
          %655 = vmatprep.subr.mxu0 0.0
          %656 = vmatpush1.msra.mxu0 0.0
          %657 = vmatprep.subr.mxu0 0.0
          %658 = vmatpush1.msra.mxu0 0.0
          %659 = vmatprep.subr.mxu0 0.0
          %660 = vmatpush1.msra.mxu0 0.0
          %661 = vmatprep.subr.mxu0 0.0
          %662 = vmatpush1.msra.mxu0 0.0
          %663 = vmatprep.subr.mxu0 0.0
          %664 = vmatpush1.msra.mxu0 0.0
          %665 = vmatprep.subr.mxu0 0.0
          %666 = vmatpush1.msra.mxu0 0.0
          %667 = vmatprep.subr.mxu0 0.0
          %668 = vmatpush1.msra.mxu0 0.0
          %669 = vmatprep.subr.mxu0 0.0
          %670 = vmatpush1.msra.mxu0 0.0
          %671 = vmatprep.subr.mxu0 0.0
          %672 = vmatpush1.msra.mxu0 0.0
          %673 = vmatprep.subr.mxu0 0.0
          %674 = vmatpush1.msra.mxu0 0.0
          %675 = vmatprep.subr.mxu0 0.0
          %676 = vmatpush1.msra.mxu0 0.0
          %677 = vmatprep.subr.mxu0 0.0
          %678 = vmatpush1.msra.mxu0 0.0
          %679 = vmatprep.subr.mxu0 0.0
          %680 = vmatpush1.msra.mxu0 0.0
          %681 = vmatprep.subr.mxu0 0.0
          %682 = vmatpush1.msra.mxu0 0.0
          %683 = vmatprep.subr.mxu0 0.0
          %684 = vmatpush1.msra.mxu0 0.0
          %685 = vmatprep.subr.mxu0 0.0
          %686 = vmatpush1.msra.mxu0 0.0
          %687 = vmatprep.subr.mxu0 0.0
          %688 = vmatpush1.msra.mxu0 0.0
          %689 = vmatprep.subr.mxu0 0.0
          %690 = vmatpush1.msra.mxu0 0.0
          %691 = vmatprep.subr.mxu0 0.0
          %692 = vmatpush1.msra.mxu0 0.0
          %693 = vmatprep.subr.mxu0 0.0
          %694 = vmatpush1.msra.mxu0 0.0
          %695 = vmatprep.mubr.f32.mxu0 0.0
          %696 = vmatmul.mubr.f32.gmra.mrb[0].mxu0 %v629
          %v697 = vpop.f32.mrb[0].mxu0
          %v698 = vadd.f32 %v626, %v697
          %v699 = vpop.f32.mrb[0].mxu0
          %700 = vdwg.mxu0
          %v701 = vmul.f32 %v698, 1.442695
          %v702 = vpow.pop %v701
          %v703 = vld [vmem:[%s392] sm:$0xff]
          %705 = vrot.lane.b32.xlu0 %v703, 16
          %v706 = vpop.permute.xlu0 %705
          %v708 = vmul.f32 %v702, %v706
          %710 = vrot.lane.b32.xlu0 %v698, 16
          %v711 = vpop.permute.xlu0 %710
          %v713 = vadd.f32 %v708, %v711
          %s714 = scalar_lea.vmem %s392, 8
          %v715 = vld [vmem:[%s714] sm:$0xff]
          %717 = vrot.lane.b32.xlu0 %v715, 16
          %v718 = vpop.permute.xlu0 %717
          %v720 = vmul.f32 %v702, %v718
          %v721 = vadd.f32 %v720, %v711
          %724 = vrot.lane.b32.xlu0 %v713, 112
          %v725 = vpop.permute.xlu0 %724
          %726 = vrot.lane.b32.xlu0 %v721, 112
          %v727 = vpop.permute.xlu0 %726
          %vm730 = vcmask 130048
          %731 = vst.msk [vmem:[#allocation3] sm:$0xff] %vm730, %v725
          %732 = vst.msk [vmem:[#allocation3 + $0x8] sm:$0xff] %vm730, %v727
          %v733 = vmul.f32 %v698, %v698
          %v734 = vsub.f32 1.0, %v733
          %v735 = vmul.f32 %v698, 2.0
          %737 = vrot.lane.b32.xlu0 %v735, 112
          %v738 = vpop.permute.xlu0 %737
          %v740 = vadd.f32 %v734, %v738
          %v741 = vmul.f32 %v702, %v702
          %743 = vrot.lane.b32.xlu0 %v741, 112
          %v744 = vpop.permute.xlu0 %743
          %v746 = vsub.f32 %v740, %v744
          %v747 = vsel %vm730, %v746, 0.0
          %748 = vadd.xlane.f32.xlu0 %v747
          %v749 = vpop.xlane.xlu0 %748
          %v750 = vmul.f32 %v749, -0.5
          %vm751 = vcmask 7168
          %752 = vst.msk [vmem:[%s396] sm:$0xff] %vm751, %v750
        $region60: #{tpu_custom_call.1} parent=51 // pred_fallthru
          _
        %p753 = scmp.lt.s32.totalorder %s26, 0
        %s754 = scalar_select %p753, %s26, 0
        %s755 = smul.addr %s754, 8
        %s756 = scalar_lea.vmem %s9, %s755
        // Predicated region
        $region61: #{tpu_custom_call.1} parent=51 // pred_check
          %p757 = pneg %p237
        $region62: #{tpu_custom_call.1} parent=51 // pred_check_branch
          %759 = sbr.rel (%p757) target = $region64
        $region63: #{tpu_custom_call.1} parent=51 // pred_region
          %s761 = ssub.s32 256, 256
          %762 = vsyncadd [#allocation4], %s761
          %s763 = smul.addr %s26, 2
          %s764 = smul.addr %s763, 128
          %s765 = scalar_lea.hbm %s8, %s764
          %s766 = sshll.u32 [#allocation3], 4
          %s767 = int_to_ptr.vmem [resolvable:$true] %s766
          %772 = dma.vmem_to_hbm [thread:$0]  %s767, 256, %s765, [#allocation4], 128, 128, 8
        $region64: #{tpu_custom_call.1} parent=51 // pred_fallthru
          _
        // Predicated region
        $region65: #{tpu_custom_call.1} parent=51 // pred_check
          %p773 = pneg %p263
        $region66: #{tpu_custom_call.1} parent=51 // pred_check_branch
          %775 = sbr.rel (%p773) target = $region68
        $region67: #{tpu_custom_call.1} parent=51 // pred_region
          _
        $region68: #{tpu_custom_call.1} parent=51 // pred_fallthru
          _
        // Predicated region
        $region69: #{tpu_custom_call.1} parent=51 // pred_check
          %p776 = pneg %p237
        $region70: #{tpu_custom_call.1} parent=51 // pred_check_branch
          %778 = sbr.rel (%p776) target = $region72
        $region71: #{tpu_custom_call.1} parent=51 // pred_region
          %779 = dma.done [#allocation4], 256
        $region72: #{tpu_custom_call.1} parent=51 // pred_fallthru
          _
        // Predicated region
        $region73: #{tpu_custom_call.1} parent=51 // pred_check
          %p780 = pneg %p263
        $region74: #{tpu_custom_call.1} parent=51 // pred_check_branch
          %782 = sbr.rel (%p780) target = $region76
        $region75: #{tpu_custom_call.1} parent=51 // pred_region
          %p783 = scmp.lt.s32.totalorder %s26, 0
          %s784 = scalar_select %p783, %s26, 0
          %s785 = smul.addr %s784, 8
          %s786 = scalar_lea.vmem %s9, %s785
        $region76: #{tpu_custom_call.1} parent=51 // pred_fallthru
          _
      $region52: #{tpu_custom_call.1} parent=5 // pred_fallthru
        _
      %p787 = scmp.le.s32.totalorder 2, %s17
      // Predicated region
      $region77: #{tpu_custom_call.1} parent=5 // pred_check
        %p788 = pneg %p787
      $region78: #{tpu_custom_call.1} parent=5 // pred_check_branch
        %790 = sbr.rel (%p788) target = $region80
      $region79: #{tpu_custom_call.1} parent=5 // pred_region
        %s791 = ssub.s32 %s17, 2
      $region80: #{tpu_custom_call.1} parent=5 // pred_fallthru
        _
    $region6: #{tpu_custom_call.1} parent=1 // loop_footer
      %s21 = sadd.s32 1, %s17
    $region7: #{tpu_custom_call.1} parent=1 // loop_footer_branch
      %16 = sbr.rel target = $region3
    $region8: #{tpu_custom_call.1} parent=1 // loop_exit
      _
    %792 = vsyncpa [#allocation4], 1
    %s793 = scalar_lea.sflag [#allocation4], 1
    %794 = vsyncpa %s793, 1

</llo_original>
